<compile_context>
chip_gen: v7x
topology: tpu7x:2x2x1
jax: 0.10.0
libtpu: 0.0.40
codegen_flags: <defaults>
</compile_context>

<pallas_src>
import functools

import jax
import jax.numpy as jnp
from jax.experimental import pallas as pl
from jax.experimental.pallas import tpu as pltpu


HIDDEN_DIM = 512  # hardcoded in the torch classifier


def _pool_mlp_kernel(x_ref, w1_ref, b1_ref, w2_ref, b2_ref, out_ref, acc_ref,
                     *, max_pool, seq_len):
    """Streamed (mean|max)-pool over seq + Linear -> ReLU -> Linear.

    Grid: (B // TB, S // TS).  Batch axis "parallel", seq axis "arbitrary" reduction.

    x_ref  : [TB, TS, H] bfloat16  (streamed seq tile)
    w1_ref : [H, 512]    float32   (resident, constant block index)
    b1_ref : [1, 512]    float32   (resident)
    w2_ref : [1, 512]    float32   (resident; second Linear stored as a row)
    b2_ref : [1, 1]      float32   (resident)
    out_ref: [TB, 1]     float32   (written only in the finalize step)
    acc_ref: [TB, H]     float32   (pooling accumulator, VMEM scratch)
    """
    s = pl.program_id(1)

    @pl.when(s == 0)
    def _init():
        if max_pool:
            acc_ref[...] = jnp.full_like(acc_ref, -jnp.inf)
        else:
            acc_ref[...] = jnp.zeros_like(acc_ref)

    x = x_ref[...].astype(jnp.float32)                 # (TB, TS, H)
    if max_pool:
        acc_ref[...] = jnp.maximum(acc_ref[...], jnp.max(x, axis=1))
    else:
        acc_ref[...] = acc_ref[...] + jnp.sum(x, axis=1)

    @pl.when(s == pl.num_programs(1) - 1)
    def _finalize():
        if max_pool:
            pooled = acc_ref[...]                      # torch: x.max(dim=1)[0]
        else:
            pooled = acc_ref[...] * (1.0 / seq_len)    # torch: x.mean(dim=1)
        # Linear(H -> 512) on the MXU.
        h = jnp.dot(pooled, w1_ref[...], preferred_element_type=jnp.float32) + b1_ref[...]
        # (Dropout(0.3) is identity at eval / use_dropout=False)
        h = jnp.maximum(h, 0.0)                        # ReLU
        # Linear(512 -> 1): N=1 matmul wastes the MXU — VPU multiply + lane reduce instead.
        out = jnp.sum(h * w2_ref[...], axis=-1, keepdims=True) + b2_ref[...]
        out_ref[...] = out                             # (TB, 1)


def _largest_divisor(n, candidates):
    for c in candidates:
        if c <= n and n % c == 0:
            return c
    return n


def pool_and_classify(hidden_states, w1, b1, w2_row, b2, *, max_pool=False,
                      tb=None, ts=None):
    """hidden_states: [B, S, H] -> logits [B] float32."""
    B, S, H = hidden_states.shape
    # Stream the big activation as bf16 (the kernel is HBM-bandwidth bound).
    hidden_states = hidden_states.astype(jnp.bfloat16)

    # --- tile selection (block last-two dims must be (mult-of-8, full-H)) ---
    if tb is None:
        tb = _largest_divisor(B, (128, 64, 32, 16, 8))          # falls back to full B
    if ts is None:
        budget = 8 * 1024 * 1024                                # ~8 MiB per streamed buffer
        cands = tuple(c for c in (1024, 512, 256, 128, 64, 32, 16, 8)
                      if tb * c * H * 2 <= budget)
        ts = _largest_divisor(S, cands) if cands else S         # falls back to full S
    assert B % tb == 0 and S % ts == 0

    grid = (B // tb, S // ts)

    # VMEM budget estimate (leave headroom; cap at v7x's 64 MiB).
    block_bytes = tb * ts * H * 2
    resident_bytes = (H * HIDDEN_DIM + 2 * HIDDEN_DIM + 1) * 4
    scratch_bytes = tb * H * 4
    vmem_est = 2 * block_bytes + 2 * resident_bytes + scratch_bytes + (2 << 20)
    vmem_limit = int(min(max(vmem_est, 16 * 2**20), 64 * 2**20))

    cost = pl.CostEstimate(
        flops=int(B * S * H + 2 * B * H * HIDDEN_DIM + 2 * B * HIDDEN_DIM),
        transcendentals=0,
        bytes_accessed=int(B * S * H * 2 + resident_bytes + B * 4),
    )

    kernel = functools.partial(_pool_mlp_kernel, max_pool=max_pool, seq_len=S)
    out = pl.pallas_call(
        kernel,
        out_shape=jax.ShapeDtypeStruct((B, 1), jnp.float32),
        grid_spec=pltpu.PrefetchScalarGridSpec(
            num_scalar_prefetch=0,
            grid=grid,
            in_specs=[
                pl.BlockSpec((tb, ts, H), lambda b, s: (b, s, 0)),        # streamed
                pl.BlockSpec((H, HIDDEN_DIM), lambda b, s: (0, 0)),       # resident
                pl.BlockSpec((1, HIDDEN_DIM), lambda b, s: (0, 0)),       # resident
                pl.BlockSpec((1, HIDDEN_DIM), lambda b, s: (0, 0)),       # resident
                pl.BlockSpec((1, 1), lambda b, s: (0, 0)),                # resident
            ],
            out_specs=pl.BlockSpec((tb, 1), lambda b, s: (b, 0)),
            scratch_shapes=[pltpu.VMEM((tb, H), jnp.float32)],
        ),
        compiler_params=pltpu.CompilerParams(
            dimension_semantics=("parallel", "arbitrary"),
            vmem_limit_bytes=vmem_limit,
        ),
        cost_estimate=cost,
    )(hidden_states, w1, b1, w2_row, b2)
    return out[:, 0]  # squeeze(-1)


def init_params(key, vocab_size, feature_dim):
    """Deterministic synthetic parameters (no checkpoint loading)."""
    k_emb, k_w1, k_b1, k_w2, k_b2 = jax.random.split(key, 5)
    scale1 = 1.0 / jnp.sqrt(jnp.float32(feature_dim))
    scale2 = 1.0 / jnp.sqrt(jnp.float32(HIDDEN_DIM))
    return {
        "embedding": jax.random.normal(k_emb, (vocab_size, feature_dim), jnp.float32) * 0.02,
        "w1": jax.random.uniform(k_w1, (feature_dim, HIDDEN_DIM), jnp.float32, -scale1, scale1),
        "b1": jax.random.uniform(k_b1, (1, HIDDEN_DIM), jnp.float32, -scale1, scale1),
        # second Linear stored as a [1, 512] row (torch [out, in] layout) -> VPU reduction
        "w2": jax.random.uniform(k_w2, (1, HIDDEN_DIM), jnp.float32, -scale2, scale2),
        "b2": jax.random.uniform(k_b2, (1, 1), jnp.float32, -scale2, scale2),
    }


def auto_model_forward(params, input_ids, attention_mask, *, max_pool=False, tb=None, ts=None):
    """Mirrors AutoModel.forward(input_ids, attention_mask)."""
    # --- backbone stand-in (glue, plain JAX) ---
    # TODO(synk): real HF backbone would consume attention_mask here.
    del attention_mask
    hidden_states = jnp.take(params["embedding"], input_ids, axis=0)       # [B, S, H]
    hidden_states = hidden_states.astype(jnp.bfloat16)                     # streamed dtype
    # --- pooling + classifier (Pallas hot path) ---
    return pool_and_classify(
        hidden_states, params["w1"], params["b1"], params["w2"], params["b2"],
        max_pool=max_pool, tb=tb, ts=ts,
    )


def _reference_forward(params, input_ids, max_pool):
    """Pure-JAX reference of the same math (same bf16 stream quantization)."""
    hs = jnp.take(params["embedding"], input_ids, axis=0)
    hs = hs.astype(jnp.bfloat16).astype(jnp.float32)
    pooled = hs.max(axis=1) if max_pool else hs.mean(axis=1)
    h = jnp.maximum(pooled @ params["w1"] + params["b1"], 0.0)
    out = jnp.sum(h * params["w2"], axis=-1, keepdims=True) + params["b2"]
    return out[:, 0]


if __name__ == "__main__":
    key = jax.random.PRNGKey(0)
    k1, k2, k3, k4 = jax.random.split(key, 4)

    # --- Test 1: toy module shapes (single grid step), mean and max pooling ---
    B, S, H, V = 2, 8, 32, 100
    params = init_params(k1, vocab_size=V, feature_dim=H)
    input_ids = jax.random.randint(k2, (B, S), 0, V, dtype=jnp.int32)
    attention_mask = jnp.ones((B, S), dtype=jnp.int32)

    logits = jax.block_until_ready(
        auto_model_forward(params, input_ids, attention_mask, max_pool=False))
    assert logits.shape == (B,)
    assert jnp.allclose(logits, _reference_forward(params, input_ids, False),
                        atol=2e-3, rtol=2e-3)

    logits_max = jax.block_until_ready(
        auto_model_forward(params, input_ids, attention_mask, max_pool=True))
    assert logits_max.shape == (B,)
    assert jnp.allclose(logits_max, _reference_forward(params, input_ids, True),
                        atol=2e-3, rtol=2e-3)

    # --- Test 2: exercise the gridded streaming reduction (2 seq steps, tiled batch) ---
    B2, S2, H2, V2 = 8, 16, 128, 100
    params2 = init_params(k3, vocab_size=V2, feature_dim=H2)
    input_ids2 = jax.random.randint(k4, (B2, S2), 0, V2, dtype=jnp.int32)
    attention_mask2 = jnp.ones((B2, S2), dtype=jnp.int32)

    out2 = jax.block_until_ready(
        auto_model_forward(params2, input_ids2, attention_mask2, max_pool=False, tb=8, ts=8))
    assert out2.shape == (B2,)
    assert jnp.allclose(out2, _reference_forward(params2, input_ids2, False),
                        atol=2e-3, rtol=2e-3)

    out2_max = jax.block_until_ready(
        auto_model_forward(params2, input_ids2, attention_mask2, max_pool=True, tb=8, ts=8))
    assert out2_max.shape == (B2,)
    assert jnp.allclose(out2_max, _reference_forward(params2, input_ids2, True),
                        atol=2e-3, rtol=2e-3)

    print("KERNEL_OK")
</pallas_src>

<mosaic_0001>
module attributes {stable_mosaic.version = 11 : i64} {
  func.func @_pool_mlp_kernel(%arg0: i32, %arg1: i32, %arg2: memref<2x8x32xbf16, #tpu.memory_space<vmem>>, %arg3: memref<32x512xf32, #tpu.memory_space<vmem>>, %arg4: memref<1x512xf32, #tpu.memory_space<vmem>>, %arg5: memref<1x512xf32, #tpu.memory_space<vmem>>, %arg6: memref<1x1xf32, #tpu.memory_space<vmem>>, %arg7: memref<2x1xf32, #tpu.memory_space<vmem>>, %arg8: memref<2x32xf32, #tpu.memory_space<vmem>>) attributes {dimension_semantics = [#tpu.dimension_semantics<parallel>, #tpu.dimension_semantics<arbitrary>], iteration_bounds = array<i64: 1, 1>, scalar_prefetch = 0 : i64, scratch_operands = 1 : i64, tpu.core_type = #tpu.core_type<tc>, window_params = [{transform_indices = @transform_0, window_bounds = array<i64: 2, 8, 32>}, {pipeline_mode = #tpu.pipeline_mode<synchronous>, transform_indices = @transform_1, window_bounds = array<i64: 32, 512>}, {pipeline_mode = #tpu.pipeline_mode<synchronous>, transform_indices = @transform_2, window_bounds = array<i64: 1, 512>}, {pipeline_mode = #tpu.pipeline_mode<synchronous>, transform_indices = @transform_3, window_bounds = array<i64: 1, 512>}, {pipeline_mode = #tpu.pipeline_mode<synchronous>, transform_indices = @transform_4, window_bounds = array<i64: 1, 1>}, {transform_indices = @transform_5, window_bounds = array<i64: 2, 1>}]} {
    %c0_i32 = arith.constant 0 : i32
    %0 = arith.cmpi eq, %arg1, %c0_i32 : i32
    %1 = arith.extui %0 : i1 to i32
    %c0_i32_0 = arith.constant 0 : i32
    %2 = arith.cmpi ne, %1, %c0_i32_0 : i32
    scf.if %2 {
      %cst_9 = arith.constant 0.000000e+00 : f32
      %12 = vector.broadcast %cst_9 : f32 to vector<2x32xf32>
      %c0_10 = arith.constant 0 : index
      %c0_11 = arith.constant 0 : index
      %13 = vector.load %arg8[%c0_10, %c0_11] : memref<2x32xf32, #tpu.memory_space<vmem>>, vector<2x32xf32>
      tpu.vector_store %arg8[%c0_10, %c0_11], %12 {strides = array<i32>} : memref<2x32xf32, #tpu.memory_space<vmem>>, vector<2x32xf32>,
    } else {
    }
    %c0 = arith.constant 0 : index
    %c0_1 = arith.constant 0 : index
    %c0_2 = arith.constant 0 : index
    %3 = vector.load %arg2[%c0, %c0_1, %c0_2] : memref<2x8x32xbf16, #tpu.memory_space<vmem>>, vector<2x8x32xbf16>
    %4 = arith.extf %3 : vector<2x8x32xbf16> to vector<2x8x32xf32>
    %c0_3 = arith.constant 0 : index
    %c0_4 = arith.constant 0 : index
    %5 = vector.load %arg8[%c0_3, %c0_4] : memref<2x32xf32, #tpu.memory_space<vmem>>, vector<2x32xf32>
    %cst = arith.constant dense<0.000000e+00> : vector<2x32xf32>
    %6 = vector.multi_reduction <add>, %4, %cst [1] : vector<2x8x32xf32> to vector<2x32xf32>
    %7 = arith.addf %5, %6 : vector<2x32xf32>
    %c0_5 = arith.constant 0 : index
    %c0_6 = arith.constant 0 : index
    %8 = vector.load %arg8[%c0_5, %c0_6] : memref<2x32xf32, #tpu.memory_space<vmem>>, vector<2x32xf32>
    tpu.vector_store %arg8[%c0_5, %c0_6], %7 {strides = array<i32>} : memref<2x32xf32, #tpu.memory_space<vmem>>, vector<2x32xf32>,
    %c0_i32_7 = arith.constant 0 : i32
    %9 = arith.cmpi eq, %arg1, %c0_i32_7 : i32
    %10 = arith.extui %9 : i1 to i32
    %c0_i32_8 = arith.constant 0 : i32
    %11 = arith.cmpi ne, %10, %c0_i32_8 : i32
    scf.if %11 {
      %c0_9 = arith.constant 0 : index
      %c0_10 = arith.constant 0 : index
      %12 = vector.load %arg8[%c0_9, %c0_10] : memref<2x32xf32, #tpu.memory_space<vmem>>, vector<2x32xf32>
      %cst_11 = arith.constant 1.250000e-01 : f32
      %13 = vector.broadcast %cst_11 : f32 to vector<2x32xf32>
      %14 = arith.mulf %12, %13 : vector<2x32xf32>
      %c0_12 = arith.constant 0 : index
      %c0_13 = arith.constant 0 : index
      %15 = vector.load %arg3[%c0_12, %c0_13] : memref<32x512xf32, #tpu.memory_space<vmem>>, vector<32x512xf32>
      %cst_14 = arith.constant dense<0.000000e+00> : vector<2x512xf32>
      %16 = tpu.matmul %14, %15, %cst_14 {dimension_numbers = #tpu.dot_dimension_numbers<[1], [0], [0], [1], [0, 0, 1, 1], [], []>} : vector<2x32xf32>, vector<32x512xf32>, vector<2x512xf32> -> vector<2x512xf32>
      %c0_15 = arith.constant 0 : index
      %c0_16 = arith.constant 0 : index
      %17 = vector.load %arg4[%c0_15, %c0_16] : memref<1x512xf32, #tpu.memory_space<vmem>>, vector<1x512xf32>
      %18 = vector.broadcast %17 : vector<1x512xf32> to vector<2x512xf32>
      %19 = arith.addf %16, %18 : vector<2x512xf32>
      %cst_17 = arith.constant 0.000000e+00 : f32
      %20 = vector.broadcast %cst_17 : f32 to vector<2x512xf32>
      %21 = arith.maximumf %19, %20 : vector<2x512xf32>
      %c0_18 = arith.constant 0 : index
      %c0_19 = arith.constant 0 : index
      %22 = vector.load %arg5[%c0_18, %c0_19] : memref<1x512xf32, #tpu.memory_space<vmem>>, vector<1x512xf32>
      %23 = vector.broadcast %22 : vector<1x512xf32> to vector<2x512xf32>
      %24 = arith.mulf %21, %23 : vector<2x512xf32>
      %cst_20 = arith.constant dense<0.000000e+00> : vector<2xf32>
      %25 = vector.multi_reduction <add>, %24, %cst_20 [1] : vector<2x512xf32> to vector<2xf32>
      %26 = vector.shape_cast %25 : vector<2xf32> to vector<2x1xf32>
      %c0_21 = arith.constant 0 : index
      %c0_22 = arith.constant 0 : index
      %27 = vector.load %arg6[%c0_21, %c0_22] : memref<1x1xf32, #tpu.memory_space<vmem>>, vector<1x1xf32>
      %28 = vector.broadcast %27 : vector<1x1xf32> to vector<2x1xf32>
      %29 = arith.addf %26, %28 : vector<2x1xf32>
      %c0_23 = arith.constant 0 : index
      %c0_24 = arith.constant 0 : index
      %30 = vector.load %arg7[%c0_23, %c0_24] : memref<2x1xf32, #tpu.memory_space<vmem>>, vector<2x1xf32>
      tpu.vector_store %arg7[%c0_23, %c0_24], %29 {strides = array<i32>} : memref<2x1xf32, #tpu.memory_space<vmem>>, vector<2x1xf32>,
    } else {
    }
    return
  }
  func.func @transform_0(%arg0: i32, %arg1: i32) -> (i32, i32, i32) {
    %c0_i32 = arith.constant 0 : i32
    %c0_i32_0 = arith.constant 0 : i32
    return %arg0, %arg1, %c0_i32 : i32, i32, i32
  }
  func.func @transform_1(%arg0: i32, %arg1: i32) -> (i32, i32) {
    %c0_i32 = arith.constant 0 : i32
    %c0_i32_0 = arith.constant 0 : i32
    %c0_i32_1 = arith.constant 0 : i32
    return %c0_i32, %c0_i32_0 : i32, i32
  }
  func.func @transform_2(%arg0: i32, %arg1: i32) -> (i32, i32) {
    %c0_i32 = arith.constant 0 : i32
    %c0_i32_0 = arith.constant 0 : i32
    %c0_i32_1 = arith.constant 0 : i32
    return %c0_i32, %c0_i32_0 : i32, i32
  }
  func.func @transform_3(%arg0: i32, %arg1: i32) -> (i32, i32) {
    %c0_i32 = arith.constant 0 : i32
    %c0_i32_0 = arith.constant 0 : i32
    %c0_i32_1 = arith.constant 0 : i32
    return %c0_i32, %c0_i32_0 : i32, i32
  }
  func.func @transform_4(%arg0: i32, %arg1: i32) -> (i32, i32) {
    %c0_i32 = arith.constant 0 : i32
    %c0_i32_0 = arith.constant 0 : i32
    %c0_i32_1 = arith.constant 0 : i32
    return %c0_i32, %c0_i32_0 : i32, i32
  }
  func.func @transform_5(%arg0: i32, %arg1: i32) -> (i32, i32) {
    %c0_i32 = arith.constant 0 : i32
    %c0_i32_0 = arith.constant 0 : i32
    return %arg0, %c0_i32 : i32, i32
  }
}

</mosaic_0001>

<llo_original>
// kernel: tpu_custom_call.1
$region0: #{tpu_custom_call.1}
  #allocation0 [shape = 'u32[]', space=smem, size = 0x4, offset = 0x4, fixed_abs, tag = 'smem constant byte address 0x4 - core index']
  #allocation1 [shape = 'u32[144,128]{1,0:T(1,128)}', space=vmem, size = 0x12000, scoped, tag = 'internal scratch']
  #allocation2 [shape = 'f32[2,32]{1,0:T(2,128)}', space=vmem, size = 0x400, scoped, tag = 'scratch operand']
  #allocation3 [shape = 'f32[1,1]{1,0:T(1,128)S(1)}', space=vmem, size = 0x200, scoped, tag = 'scoped memory for tpu_custom_call.1']
  %s0 = inlined_call_operand.hbm [shape: bf16[2,8,32], index: 0, kind: input, shape index: {}]
  %s1 = inlined_call_operand.hbm [shape: f32[32,512], index: 1, kind: input, shape index: {}]
  %s2 = inlined_call_operand.vmem [shape: f32[1,512], index: 2, kind: input, shape index: {}]
  %s3 = inlined_call_operand.vmem [shape: f32[1,512], index: 3, kind: input, shape index: {}]
  %s4 = inlined_call_operand.<no memory space> [shape: f32[1,1], index: 4, kind: input, shape index: {}]
  %s5 = inlined_call_operand.vmem [shape: f32[2,1], index: 5, kind: output, shape index: {}]
  %s6 = sld [smem:[#allocation0]]
  $region46: #{tpu_custom_call.1} parent=0
    _
  %s8 = ssub.s32 1, %s6
  %s9 = scalar_select 0, %s8, %s6
  %v10 = vstv %s4
  %11 = vst [vmem:[#allocation3] sm:$0x1] %v10
  $region1: #{tpu_custom_call.1} parent=0
    #allocation4 [shape = 'u8[4096]{0}', space=vmem, size = 0x1000, scoped, tag = 'input window, operand 0, single buffered']
    #allocation5 [shape = 's32[1]{0}', space=sflag, size = 0x4, scoped, tag = 'scoped memory for tpu_custom_call.1']
    #allocation6 [shape = 'u8[65536]{0}', space=vmem, size = 0x10000, scoped, tag = 'input window, operand 1, single buffered']
    #allocation7 [shape = 's32[1]{0}', space=sflag, size = 0x4, scoped, tag = 'scoped memory for tpu_custom_call.1']
    %12 = vsyncpa [#allocation5], 0
    %13 = vsyncpa [#allocation7], 0
    // Predicated region
    $region2: #{tpu_custom_call.1} parent=1 // pred_check
      _
    $region3: #{tpu_custom_call.1} parent=1 // pred_check_branch
      %15 = sbr.rel (0) target = $region5
    $region4: #{tpu_custom_call.1} parent=1 // pred_region
      %s17 = ssub.s32 128, 128
      %18 = vsyncadd [#allocation5], %s17
      %s19 = sshll.u32 [#allocation4], 4
      %s20 = int_to_ptr.vmem [resolvable:$true] %s19
      %25 = dma.hbm_to_vmem [thread:$0]  %s0, 128, %s20, [#allocation5], 64, 64, 4
    $region5: #{tpu_custom_call.1} parent=1 // pred_fallthru
      _
    // Predicated region
    $region6: #{tpu_custom_call.1} parent=1 // pred_check
      _
    $region7: #{tpu_custom_call.1} parent=1 // pred_check_branch
      %27 = sbr.rel (0) target = $region9
    $region8: #{tpu_custom_call.1} parent=1 // pred_region
      %s29 = ssub.s32 2048, 2048
      %30 = vsyncadd [#allocation7], %s29
      %s31 = sshll.u32 [#allocation6], 4
      %s32 = int_to_ptr.vmem [resolvable:$true] %s31
      %37 = dma.hbm_to_vmem [thread:$0]  %s1, 2048, %s32, [#allocation7], 512, 512, 32
    $region9: #{tpu_custom_call.1} parent=1 // pred_fallthru
      _
    // Predicated region
    $region10: #{tpu_custom_call.1} parent=1 // pred_check
      _
    $region11: #{tpu_custom_call.1} parent=1 // pred_check_branch
      %39 = sbr.rel (0) target = $region13
    $region12: #{tpu_custom_call.1} parent=1 // pred_region
      _
    $region13: #{tpu_custom_call.1} parent=1 // pred_fallthru
      _
    // Predicated region
    $region14: #{tpu_custom_call.1} parent=1 // pred_check
      _
    $region15: #{tpu_custom_call.1} parent=1 // pred_check_branch
      %41 = sbr.rel (0) target = $region17
    $region16: #{tpu_custom_call.1} parent=1 // pred_region
      _
    $region17: #{tpu_custom_call.1} parent=1 // pred_fallthru
      _
    // Predicated region
    $region18: #{tpu_custom_call.1} parent=1 // pred_check
      _
    $region19: #{tpu_custom_call.1} parent=1 // pred_check_branch
      %43 = sbr.rel (0) target = $region21
    $region20: #{tpu_custom_call.1} parent=1 // pred_region
      _
    $region21: #{tpu_custom_call.1} parent=1 // pred_fallthru
      _
    // Predicated region
    $region22: #{tpu_custom_call.1} parent=1 // pred_check
      _
    $region23: #{tpu_custom_call.1} parent=1 // pred_check_branch
      %45 = sbr.rel (0) target = $region25
    $region24: #{tpu_custom_call.1} parent=1 // pred_region
      %46 = dma.done [#allocation5], 128
    $region25: #{tpu_custom_call.1} parent=1 // pred_fallthru
      _
    // Predicated region
    $region26: #{tpu_custom_call.1} parent=1 // pred_check
      _
    $region27: #{tpu_custom_call.1} parent=1 // pred_check_branch
      %48 = sbr.rel (0) target = $region29
    $region28: #{tpu_custom_call.1} parent=1 // pred_region
      %49 = dma.done [#allocation7], 2048
    $region29: #{tpu_custom_call.1} parent=1 // pred_fallthru
      _
    %p50 = scmp.eq.s32.totalorder 0, 0
    // Predicated region
    $region30: #{tpu_custom_call.1} parent=1 // pred_check
      %p51 = pneg %p50
    $region31: #{tpu_custom_call.1} parent=1 // pred_check_branch
      %53 = sbr.rel (%p51) target = $region33
    $region32: #{tpu_custom_call.1} parent=1 // pred_region
      %vm54 = vcmask 254976
      %55 = vst.msk [vmem:[#allocation2] sm:$0x3] %vm54, 0.0
    $region33: #{tpu_custom_call.1} parent=1 // pred_fallthru
      _
    %v56 = vld [vmem:[#allocation4] sm:$0xf]
    %v57 = vld [vmem:[#allocation4 + $0x4] sm:$0xf]
    %v58 = vunpack.c.l.bf16 %v56
    %v59 = vunpack.c.l.bf16 %v57
    %v60 = vld [vmem:[#allocation2] sm:$0x3]
    %vm61 = vcmask 261120
    %v62 = vsel %vm61, %v58, 0.0
    %v63 = vrot.slane %v62, 4
    %v64 = vadd.f32 %v62, %v63
    %v65 = vrot.slane %v64, 2
    %v66 = vadd.f32 %v64, %v65
    %v67 = vrot.slane %v66, 1
    %v68 = vadd.f32 %v66, %v67
    %v69 = vsel %vm61, %v59, 0.0
    %v70 = vrot.slane %v69, 4
    %v71 = vadd.f32 %v69, %v70
    %v72 = vrot.slane %v71, 2
    %v73 = vadd.f32 %v71, %v72
    %v74 = vrot.slane %v73, 1
    %v75 = vadd.f32 %v73, %v74
    %vm78 = vcmask 1041409
    %v79 = vsel %vm78, %v75, %v68
    %v81 = vadd.f32 %v60, %v79
    %vm82 = vcmask 254976
    %83 = vst.msk [vmem:[#allocation2] sm:$0x3] %vm82, %v81
    // Predicated region
    $region34: #{tpu_custom_call.1} parent=1 // pred_check
      %p84 = pneg %p50
    $region35: #{tpu_custom_call.1} parent=1 // pred_check_branch
      %86 = sbr.rel (%p84) target = $region37
    $region36: #{tpu_custom_call.1} parent=1 // pred_region
      %v87 = vld [vmem:[#allocation2] sm:$0x3]
      %v88 = vmul.f32 %v87, 0.125
      %v89 = vld [vmem:[#allocation6] sm:$0xff]
      %v90 = vld [vmem:[#allocation6 + $0x8] sm:$0xff]
      %v91 = vld [vmem:[#allocation6 + $0x10] sm:$0xff]
      %v92 = vld [vmem:[#allocation6 + $0x18] sm:$0xff]
      %v93 = vld [vmem:[#allocation6 + $0x20] sm:$0xff]
      %v94 = vld [vmem:[#allocation6 + $0x28] sm:$0xff]
      %v95 = vld [vmem:[#allocation6 + $0x30] sm:$0xff]
      %v96 = vld [vmem:[#allocation6 + $0x38] sm:$0xff]
      %v97 = vld [vmem:[#allocation6 + $0x40] sm:$0xff]
      %v98 = vld [vmem:[#allocation6 + $0x48] sm:$0xff]
      %v99 = vld [vmem:[#allocation6 + $0x50] sm:$0xff]
      %v100 = vld [vmem:[#allocation6 + $0x58] sm:$0xff]
      %v101 = vld [vmem:[#allocation6 + $0x60] sm:$0xff]
      %v102 = vld [vmem:[#allocation6 + $0x68] sm:$0xff]
      %v103 = vld [vmem:[#allocation6 + $0x70] sm:$0xff]
      %v104 = vld [vmem:[#allocation6 + $0x78] sm:$0xff]
      %v105 = vld [vmem:[%s2] sm:$0xf]
      %v107 = vlaneseq
      %v108 = vshrl.u32 %v107, 7
      %v109 = vsub.s32 0, %v108
      %v110 = vrot.slane %v105, %v109
      %v111 = vlaneseq
      %v112 = vshrl.u32 %v111, 7
      %v113 = vsub.s32 1, %v112
      %v114 = vrot.slane %v105, %v113
      %v115 = vlaneseq
      %v116 = vshrl.u32 %v115, 7
      %v117 = vsub.s32 2, %v116
      %v118 = vrot.slane %v105, %v117
      %v119 = vlaneseq
      %v120 = vshrl.u32 %v119, 7
      %v121 = vsub.s32 3, %v120
      %v122 = vrot.slane %v105, %v121
      %v128 = vsel %vm61, %v88, 0
      %130 = vmatprep.subr.mxu0 %v90
      %131 = vmatpush1.msra.mxu0 %v89
      %132 = vmatprep.subr.mxu0 %v94
      %133 = vmatpush1.msra.mxu0 %v93
      %134 = vmatprep.subr.mxu0 %v98
      %135 = vmatpush1.msra.mxu0 %v97
      %136 = vmatprep.subr.mxu0 %v102
      %137 = vmatpush1.msra.mxu0 %v101
      %138 = vmatprep.subr.mxu0 0.0
      %139 = vmatpush1.msra.mxu0 0.0
      %140 = vmatprep.subr.mxu0 0.0
      %141 = vmatpush1.msra.mxu0 0.0
      %142 = vmatprep.subr.mxu0 0.0
      %143 = vmatpush1.msra.mxu0 0.0
      %144 = vmatprep.subr.mxu0 0.0
      %145 = vmatpush1.msra.mxu0 0.0
      %146 = vmatprep.subr.mxu0 0.0
      %147 = vmatpush1.msra.mxu0 0.0
      %148 = vmatprep.subr.mxu0 0.0
      %149 = vmatpush1.msra.mxu0 0.0
      %150 = vmatprep.subr.mxu0 0.0
      %151 = vmatpush1.msra.mxu0 0.0
      %152 = vmatprep.subr.mxu0 0.0
      %153 = vmatpush1.msra.mxu0 0.0
      %154 = vmatprep.subr.mxu0 0.0
      %155 = vmatpush1.msra.mxu0 0.0
      %156 = vmatprep.subr.mxu0 0.0
      %157 = vmatpush1.msra.mxu0 0.0
      %158 = vmatprep.subr.mxu0 0.0
      %159 = vmatpush1.msra.mxu0 0.0
      %160 = vmatprep.subr.mxu0 0.0
      %161 = vmatpush1.msra.mxu0 0.0
      %162 = vmatprep.subr.mxu0 0.0
      %163 = vmatpush1.msra.mxu0 0.0
      %164 = vmatprep.subr.mxu0 0.0
      %165 = vmatpush1.msra.mxu0 0.0
      %166 = vmatprep.subr.mxu0 0.0
      %167 = vmatpush1.msra.mxu0 0.0
      %168 = vmatprep.subr.mxu0 0.0
      %169 = vmatpush1.msra.mxu0 0.0
      %170 = vmatprep.subr.mxu0 0.0
      %171 = vmatpush1.msra.mxu0 0.0
      %172 = vmatprep.subr.mxu0 0.0
      %173 = vmatpush1.msra.mxu0 0.0
      %174 = vmatprep.subr.mxu0 0.0
      %175 = vmatpush1.msra.mxu0 0.0
      %176 = vmatprep.subr.mxu0 0.0
      %177 = vmatpush1.msra.mxu0 0.0
      %178 = vmatprep.subr.mxu0 0.0
      %179 = vmatpush1.msra.mxu0 0.0
      %180 = vmatprep.subr.mxu0 0.0
      %181 = vmatpush1.msra.mxu0 0.0
      %182 = vmatprep.subr.mxu0 0.0
      %183 = vmatpush1.msra.mxu0 0.0
      %184 = vmatprep.subr.mxu0 0.0
      %185 = vmatpush1.msra.mxu0 0.0
      %186 = vmatprep.subr.mxu0 0.0
      %187 = vmatpush1.msra.mxu0 0.0
      %188 = vmatprep.subr.mxu0 0.0
      %189 = vmatpush1.msra.mxu0 0.0
      %190 = vmatprep.subr.mxu0 0.0
      %191 = vmatpush1.msra.mxu0 0.0
      %192 = vmatprep.subr.mxu0 0.0
      %193 = vmatpush1.msra.mxu0 0.0
      %194 = vmatprep.mubr.f32.mxu0 0.0
      %195 = vmatmul.mubr.f32.gmra.mrb[0].mxu0 %v128
      %v196 = vpop.f32.mrb[0].mxu0
      %v197 = vadd.f32 %v110, %v196
      %v198 = vpop.f32.mrb[0].mxu0
      %v199 = vadd.f32 %v114, %v198
      %200 = vdwg.mxu0
      %201 = vmatprep.subr.mxu0 %v92
      %202 = vmatpush1.msra.mxu0 %v91
      %203 = vmatprep.subr.mxu0 %v96
      %204 = vmatpush1.msra.mxu0 %v95
      %205 = vmatprep.subr.mxu0 %v100
      %206 = vmatpush1.msra.mxu0 %v99
      %207 = vmatprep.subr.mxu0 %v104
      %208 = vmatpush1.msra.mxu0 %v103
      %209 = vmatprep.subr.mxu0 0.0
      %210 = vmatpush1.msra.mxu0 0.0
      %211 = vmatprep.subr.mxu0 0.0
      %212 = vmatpush1.msra.mxu0 0.0
      %213 = vmatprep.subr.mxu0 0.0
      %214 = vmatpush1.msra.mxu0 0.0
      %215 = vmatprep.subr.mxu0 0.0
      %216 = vmatpush1.msra.mxu0 0.0
      %217 = vmatprep.subr.mxu0 0.0
      %218 = vmatpush1.msra.mxu0 0.0
      %219 = vmatprep.subr.mxu0 0.0
      %220 = vmatpush1.msra.mxu0 0.0
      %221 = vmatprep.subr.mxu0 0.0
      %222 = vmatpush1.msra.mxu0 0.0
      %223 = vmatprep.subr.mxu0 0.0
      %224 = vmatpush1.msra.mxu0 0.0
      %225 = vmatprep.subr.mxu0 0.0
      %226 = vmatpush1.msra.mxu0 0.0
      %227 = vmatprep.subr.mxu0 0.0
      %228 = vmatpush1.msra.mxu0 0.0
      %229 = vmatprep.subr.mxu0 0.0
      %230 = vmatpush1.msra.mxu0 0.0
      %231 = vmatprep.subr.mxu0 0.0
      %232 = vmatpush1.msra.mxu0 0.0
      %233 = vmatprep.subr.mxu0 0.0
      %234 = vmatpush1.msra.mxu0 0.0
      %235 = vmatprep.subr.mxu0 0.0
      %236 = vmatpush1.msra.mxu0 0.0
      %237 = vmatprep.subr.mxu0 0.0
      %238 = vmatpush1.msra.mxu0 0.0
      %239 = vmatprep.subr.mxu0 0.0
      %240 = vmatpush1.msra.mxu0 0.0
      %241 = vmatprep.subr.mxu0 0.0
      %242 = vmatpush1.msra.mxu0 0.0
      %243 = vmatprep.subr.mxu0 0.0
      %244 = vmatpush1.msra.mxu0 0.0
      %245 = vmatprep.subr.mxu0 0.0
      %246 = vmatpush1.msra.mxu0 0.0
      %247 = vmatprep.subr.mxu0 0.0
      %248 = vmatpush1.msra.mxu0 0.0
      %249 = vmatprep.subr.mxu0 0.0
      %250 = vmatpush1.msra.mxu0 0.0
      %251 = vmatprep.subr.mxu0 0.0
      %252 = vmatpush1.msra.mxu0 0.0
      %253 = vmatprep.subr.mxu0 0.0
      %254 = vmatpush1.msra.mxu0 0.0
      %255 = vmatprep.subr.mxu0 0.0
      %256 = vmatpush1.msra.mxu0 0.0
      %257 = vmatprep.subr.mxu0 0.0
      %258 = vmatpush1.msra.mxu0 0.0
      %259 = vmatprep.subr.mxu0 0.0
      %260 = vmatpush1.msra.mxu0 0.0
      %261 = vmatprep.subr.mxu0 0.0
      %262 = vmatpush1.msra.mxu0 0.0
      %263 = vmatprep.subr.mxu0 0.0
      %264 = vmatpush1.msra.mxu0 0.0
      %265 = vmatprep.mubr.f32.mxu0 0.0
      %266 = vmatmul.mubr.f32.gmra.mrb[0].mxu0 %v128
      %v267 = vpop.f32.mrb[0].mxu0
      %v268 = vadd.f32 %v118, %v267
      %v269 = vpop.f32.mrb[0].mxu0
      %v270 = vadd.f32 %v122, %v269
      %271 = vdwg.mxu0
      %v272 = vmax.f32 %v197, 0.0
      %v273 = vmax.f32 %v199, 0.0
      %v274 = vmax.f32 %v268, 0.0
      %v275 = vmax.f32 %v270, 0.0
      %v276 = vld [vmem:[%s3] sm:$0xf]
      %v278 = vlaneseq
      %v279 = vshrl.u32 %v278, 7
      %v280 = vsub.s32 0, %v279
      %v281 = vrot.slane %v276, %v280
      %v282 = vlaneseq
      %v283 = vshrl.u32 %v282, 7
      %v284 = vsub.s32 1, %v283
      %v285 = vrot.slane %v276, %v284
      %v286 = vlaneseq
      %v287 = vshrl.u32 %v286, 7
      %v288 = vsub.s32 2, %v287
      %v289 = vrot.slane %v276, %v288
      %v290 = vlaneseq
      %v291 = vshrl.u32 %v290, 7
      %v292 = vsub.s32 3, %v291
      %v293 = vrot.slane %v276, %v292
      %v298 = vmul.f32 %v272, %v281
      %v299 = vmul.f32 %v273, %v285
      %v300 = vmul.f32 %v274, %v289
      %v301 = vmul.f32 %v275, %v293
      %vm302 = vcmask 1041408
      %v303 = vsel %vm302, %v298, 0.0
      %v304 = vsel %vm302, %v299, 0.0
      %v305 = vadd.f32 %v303, %v304
      %v306 = vsel %vm302, %v300, 0.0
      %v307 = vadd.f32 %v305, %v306
      %v308 = vsel %vm302, %v301, 0.0
      %v309 = vadd.f32 %v307, %v308
      %310 = vadd.xlane.f32.xlu0 %v309
      %v311 = vpop.xlane.xlu0 %310
      %v312 = vld [vmem:[#allocation3] sm:$0x1]
      %v314 = vlaneseq
      %v315 = vshrl.u32 %v314, 7
      %v316 = vsub.s32 0, %v315
      %v317 = vrot.slane %v312, %v316
      %v319 = vadd.f32 %v311, %v317
      %vm320 = vcmask 1024
      %321 = vst.msk [vmem:[%s5] sm:$0x3] %vm320, %v319
    $region37: #{tpu_custom_call.1} parent=1 // pred_fallthru
      _
    // Predicated region
    $region38: #{tpu_custom_call.1} parent=1 // pred_check
      _
    $region39: #{tpu_custom_call.1} parent=1 // pred_check_branch
      %323 = sbr.rel (0) target = $region41
    $region40: #{tpu_custom_call.1} parent=1 // pred_region
      _
    $region41: #{tpu_custom_call.1} parent=1 // pred_fallthru
      _
    // Predicated region
    $region42: #{tpu_custom_call.1} parent=1 // pred_check
      _
    $region43: #{tpu_custom_call.1} parent=1 // pred_check_branch
      %325 = sbr.rel (0) target = $region45
    $region44: #{tpu_custom_call.1} parent=1 // pred_region
      _
    $region45: #{tpu_custom_call.1} parent=1 // pred_fallthru
      _
    %326 = vsyncpa [#allocation5], 1
    %327 = vsyncpa [#allocation7], 1

</llo_original>
